<compile_context>
chip_gen: v6e
topology: v6e:2x2x1
jax: 0.10.0
libtpu: 0.0.40
codegen_flags: <defaults>
</compile_context>

<pallas_src>
import jax
import jax.numpy as jnp
from jax.experimental import pallas as pl
from jax.experimental.pallas import tpu as pltpu

SUBLANE = 8


def _round_up(x, m):
    return (x + m - 1) // m * m


def actor_kernel(x_ref, w1_ref, b1_ref, wh_ref, bh_ref, o_ref):
    # Per-tile cast of x to the matmul operand dtype (hidden under the DMA).
    x = x_ref[...].astype(w1_ref.dtype)
    # Encoder first Linear + LeakyReLU(0.01); f32 accumulation on the MXU.
    h = jnp.dot(x, w1_ref[...], preferred_element_type=jnp.float32) + b1_ref[...]
    h = jnp.maximum(h, 0.01 * h)                      # LeakyReLU(0.01), f32 VPU
    # Folded (encoder-Linear2 @ head-Linear1 @ head-Linear2): one matmul.
    out = jnp.dot(h.astype(wh_ref.dtype), wh_ref[...],
                  preferred_element_type=jnp.float32) + bh_ref[...]
    o_ref[...] = out.astype(o_ref.dtype)


def actor_layer_forward(x, params, *, tile_b=2048, compute_dtype=jnp.bfloat16):
    (w1, b1, w2, b2, w3, b3, w4, b4) = params
    batch, input_dim = x.shape
    out_dim = w4.shape[1]

    # ---- Fold everything after the LeakyReLU into one (128, out_dim) matmul.
    # Exact in real arithmetic (fp reassociation only); done in f32, cast once.
    w_head = jnp.dot(jnp.dot(w2, w3, preferred_element_type=jnp.float32), w4,
                     preferred_element_type=jnp.float32)
    b_head = (jnp.dot(jnp.dot(b2, w3, preferred_element_type=jnp.float32), w4,
                      preferred_element_type=jnp.float32)
              + jnp.dot(b3, w4, preferred_element_type=jnp.float32) + b4)

    # ---- Batch tiling: pad only up to a sublane multiple (<= 7 extra rows).
    batch_pad = _round_up(batch, SUBLANE)
    if batch_pad != batch:
        x = jnp.pad(x, ((0, batch_pad - batch), (0, 0)))
    tile_b = max(SUBLANE, min(_round_up(tile_b, SUBLANE), batch_pad))
    grid = (pl.cdiv(batch_pad, tile_b),)

    # Matmul operands in compute_dtype (weights cast once; x cast in-kernel).
    # Biases stay f32 since they are added after the f32 accumulation.
    w1c = w1.astype(compute_dtype)
    whc = w_head.astype(compute_dtype)
    b1f = b1.astype(jnp.float32)
    bhf = b_head.astype(jnp.float32)

    x_spec = pl.BlockSpec((tile_b, input_dim), lambda i: (i, 0))
    out_spec = pl.BlockSpec((tile_b, out_dim), lambda i: (i, 0))

    def resident(arr):                      # weights/biases stay in VMEM
        return pl.BlockSpec(arr.shape, lambda i: (0, 0))

    flops = 2 * batch_pad * (input_dim * 128 + 128 * out_dim)
    bytes_accessed = (
        x.size * x.dtype.itemsize
        + batch_pad * out_dim * 4
        + sum(a.size * a.dtype.itemsize for a in (w1c, b1f, whc, bhf)))
    cost = pl.CostEstimate(flops=flops, transcendentals=0,
                           bytes_accessed=bytes_accessed)

    # TODO(synk): on v7x, verify the batch grid is sharded across both
    # TensorCores; if plain "parallel" does not shard it, switch this axis to
    # pltpu.CORE_PARALLEL (no-op on single-core v5e/v6e).
    out = pl.pallas_call(
        actor_kernel,
        out_shape=jax.ShapeDtypeStruct((batch_pad, out_dim), jnp.float32),
        grid=grid,
        in_specs=[x_spec,
                  resident(w1c), resident(b1f),
                  resident(whc), resident(bhf)],
        out_specs=out_spec,
        compiler_params=pltpu.CompilerParams(
            dimension_semantics=("parallel",)),
        cost_estimate=cost,
    )(x, w1c, b1f, whc, bhf)

    return out[:batch]


def init_params(key, input_dim, embedding_size, sat_all_count):
    # Matches PyTorch _init_weights: Linear weights ~ N(0, 0.01), biases = 0.
    # Weights are stored as (in, out) so the kernel computes x @ W + b.
    ks = jax.random.split(key, 4)
    std = 0.01
    w1 = std * jax.random.normal(ks[0], (input_dim, 128), jnp.float32)
    b1 = jnp.zeros((1, 128), jnp.float32)
    w2 = std * jax.random.normal(ks[1], (128, embedding_size), jnp.float32)
    b2 = jnp.zeros((1, embedding_size), jnp.float32)
    w3 = std * jax.random.normal(ks[2], (embedding_size, 128), jnp.float32)
    b3 = jnp.zeros((1, 128), jnp.float32)
    w4 = std * jax.random.normal(ks[3], (128, sat_all_count), jnp.float32)
    b4 = jnp.zeros((1, sat_all_count), jnp.float32)
    return (w1, b1, w2, b2, w3, b3, w4, b4)


def reference_forward(x, params):
    # Literal 4-matmul forward, same as the PyTorch module.
    (w1, b1, w2, b2, w3, b3, w4, b4) = params
    h = x @ w1 + b1
    h = jnp.where(h > 0, h, 0.01 * h)
    emb = h @ w2 + b2
    h2 = emb @ w3 + b3
    return h2 @ w4 + b4


if __name__ == "__main__":
    # Small synthetic configuration consistent with the module's __init__.
    sat_all_count = 8
    api_all_count = 16    # unused in forward
    sat_fea_count = 4     # unused in forward
    api_fea_count = 4
    embedding_size = 32
    input_dim = sat_all_count * 7 + api_fea_count * 2   # = 64
    batch = 8

    key = jax.random.PRNGKey(0)
    k_in, k_par = jax.random.split(key)
    x = jax.random.normal(k_in, (batch, input_dim), jnp.float32)
    params = init_params(k_par, input_dim, embedding_size, sat_all_count)

    ref = reference_forward(x, params)

    # Exact-math path (the head fold only reassociates fp ops).
    out_f32 = jax.block_until_ready(
        actor_layer_forward(x, params, compute_dtype=jnp.float32))
    assert out_f32.shape == (batch, sat_all_count)
    assert jnp.allclose(out_f32, ref, atol=1e-5, rtol=1e-5)

    # Default bf16 matmul-operand fast path: loose, norm-relative check.
    out_bf16 = jax.block_until_ready(actor_layer_forward(x, params))
    assert out_bf16.shape == (batch, sat_all_count)
    rel = jnp.linalg.norm(out_bf16 - ref) / (jnp.linalg.norm(ref) + 1e-12)
    assert rel < 5e-2

    print("KERNEL_OK")
</pallas_src>

<mosaic_0001>
module attributes {stable_mosaic.version = 11 : i64} {
  func.func @actor_kernel(%arg0: i32, %arg1: memref<8x64xf32, #tpu.memory_space<vmem>>, %arg2: memref<64x128xf32, #tpu.memory_space<vmem>>, %arg3: memref<1x128xf32, #tpu.memory_space<vmem>>, %arg4: memref<128x8xf32, #tpu.memory_space<vmem>>, %arg5: memref<1x8xf32, #tpu.memory_space<vmem>>, %arg6: memref<8x8xf32, #tpu.memory_space<vmem>>) attributes {dimension_semantics = [#tpu.dimension_semantics<parallel>], iteration_bounds = array<i64: 1>, scalar_prefetch = 0 : i64, scratch_operands = 0 : i64, tpu.core_type = #tpu.core_type<tc>, window_params = [{transform_indices = @transform_0, window_bounds = array<i64: 8, 64>}, {pipeline_mode = #tpu.pipeline_mode<synchronous>, transform_indices = @transform_1, window_bounds = array<i64: 64, 128>}, {pipeline_mode = #tpu.pipeline_mode<synchronous>, transform_indices = @transform_2, window_bounds = array<i64: 1, 128>}, {pipeline_mode = #tpu.pipeline_mode<synchronous>, transform_indices = @transform_3, window_bounds = array<i64: 128, 8>}, {pipeline_mode = #tpu.pipeline_mode<synchronous>, transform_indices = @transform_4, window_bounds = array<i64: 1, 8>}, {transform_indices = @transform_5, window_bounds = array<i64: 8, 8>}]} {
    %c0 = arith.constant 0 : index
    %c0_0 = arith.constant 0 : index
    %0 = vector.load %arg1[%c0, %c0_0] : memref<8x64xf32, #tpu.memory_space<vmem>>, vector<8x64xf32>
    %c0_1 = arith.constant 0 : index
    %c0_2 = arith.constant 0 : index
    %1 = vector.load %arg2[%c0_1, %c0_2] : memref<64x128xf32, #tpu.memory_space<vmem>>, vector<64x128xf32>
    %cst = arith.constant dense<0.000000e+00> : vector<8x128xf32>
    %2 = tpu.matmul %0, %1, %cst {dimension_numbers = #tpu.dot_dimension_numbers<[1], [0], [0], [1], [0, 0, 1, 1], [], []>} : vector<8x64xf32>, vector<64x128xf32>, vector<8x128xf32> -> vector<8x128xf32>
    %c0_3 = arith.constant 0 : index
    %c0_4 = arith.constant 0 : index
    %3 = vector.load %arg3[%c0_3, %c0_4] : memref<1x128xf32, #tpu.memory_space<vmem>>, vector<1x128xf32>
    %4 = vector.broadcast %3 : vector<1x128xf32> to vector<8x128xf32>
    %5 = arith.addf %2, %4 : vector<8x128xf32>
    %cst_5 = arith.constant 0.00999999977 : f32
    %6 = vector.broadcast %cst_5 : f32 to vector<8x128xf32>
    %7 = arith.mulf %6, %5 : vector<8x128xf32>
    %8 = arith.maximumf %5, %7 : vector<8x128xf32>
    %c0_6 = arith.constant 0 : index
    %c0_7 = arith.constant 0 : index
    %9 = vector.load %arg4[%c0_6, %c0_7] : memref<128x8xf32, #tpu.memory_space<vmem>>, vector<128x8xf32>
    %cst_8 = arith.constant dense<0.000000e+00> : vector<8x8xf32>
    %10 = tpu.matmul %8, %9, %cst_8 {dimension_numbers = #tpu.dot_dimension_numbers<[1], [0], [0], [1], [0, 0, 1, 1], [], []>} : vector<8x128xf32>, vector<128x8xf32>, vector<8x8xf32> -> vector<8x8xf32>
    %c0_9 = arith.constant 0 : index
    %c0_10 = arith.constant 0 : index
    %11 = vector.load %arg5[%c0_9, %c0_10] : memref<1x8xf32, #tpu.memory_space<vmem>>, vector<1x8xf32>
    %12 = vector.broadcast %11 : vector<1x8xf32> to vector<8x8xf32>
    %13 = arith.addf %10, %12 : vector<8x8xf32>
    %c0_11 = arith.constant 0 : index
    %c0_12 = arith.constant 0 : index
    %14 = vector.load %arg6[%c0_11, %c0_12] : memref<8x8xf32, #tpu.memory_space<vmem>>, vector<8x8xf32>
    tpu.vector_store %arg6[%c0_11, %c0_12], %13 {strides = array<i32>} : memref<8x8xf32, #tpu.memory_space<vmem>>, vector<8x8xf32>,
    return
  }
  func.func @transform_0(%arg0: i32) -> (i32, i32) {
    %c0_i32 = arith.constant 0 : i32
    %c0_i32_0 = arith.constant 0 : i32
    return %arg0, %c0_i32 : i32, i32
  }
  func.func @transform_1(%arg0: i32) -> (i32, i32) {
    %c0_i32 = arith.constant 0 : i32
    %c0_i32_0 = arith.constant 0 : i32
    %c0_i32_1 = arith.constant 0 : i32
    return %c0_i32, %c0_i32_0 : i32, i32
  }
  func.func @transform_2(%arg0: i32) -> (i32, i32) {
    %c0_i32 = arith.constant 0 : i32
    %c0_i32_0 = arith.constant 0 : i32
    %c0_i32_1 = arith.constant 0 : i32
    return %c0_i32, %c0_i32_0 : i32, i32
  }
  func.func @transform_3(%arg0: i32) -> (i32, i32) {
    %c0_i32 = arith.constant 0 : i32
    %c0_i32_0 = arith.constant 0 : i32
    %c0_i32_1 = arith.constant 0 : i32
    return %c0_i32, %c0_i32_0 : i32, i32
  }
  func.func @transform_4(%arg0: i32) -> (i32, i32) {
    %c0_i32 = arith.constant 0 : i32
    %c0_i32_0 = arith.constant 0 : i32
    %c0_i32_1 = arith.constant 0 : i32
    return %c0_i32, %c0_i32_0 : i32, i32
  }
  func.func @transform_5(%arg0: i32) -> (i32, i32) {
    %c0_i32 = arith.constant 0 : i32
    %c0_i32_0 = arith.constant 0 : i32
    return %arg0, %c0_i32 : i32, i32
  }
}

</mosaic_0001>

<llo_original>
// kernel: tpu_custom_call.1
$region0: #{tpu_custom_call.1}
  #allocation0 [shape = 'u32[]', space=smem, size = 0x4, offset = 0x4, fixed_abs, tag = 'smem constant byte address 0x4 - core index']
  #allocation1 [shape = 'u32[144,128]{1,0:T(1,128)}', space=vmem, size = 0x12000, scoped, tag = 'internal scratch']
  %s0 = inlined_call_operand.vmem [shape: f32[8,64], index: 0, kind: input, shape index: {}]
  %s1 = inlined_call_operand.vmem [shape: f32[64,128], index: 1, kind: input, shape index: {}]
  %s2 = inlined_call_operand.vmem [shape: f32[1,128], index: 2, kind: input, shape index: {}]
  %s3 = inlined_call_operand.vmem [shape: f32[128,8], index: 3, kind: input, shape index: {}]
  %s4 = inlined_call_operand.vmem [shape: f32[1,8], index: 4, kind: input, shape index: {}]
  %s5 = inlined_call_operand.hbm [shape: f32[8,8], index: 5, kind: output, shape index: {}]
  %s6 = sld [smem:[#allocation0]]
  $region30: #{tpu_custom_call.1} parent=0
    _
  %s8 = ssub.s32 1, %s6
  %s9 = scalar_select 0, %s8, %s6
  $region1: #{tpu_custom_call.1} parent=0
    #allocation2 [shape = 'u8[4096]{0}', space=vmem, size = 0x1000, scoped, tag = 'output window, operand 0, single buffered']
    #allocation3 [shape = 's32[1]{0}', space=sflag, size = 0x4, scoped, tag = 'scoped memory for tpu_custom_call.1']
    %10 = vsyncpa [#allocation3], 0
    // Predicated region
    $region2: #{tpu_custom_call.1} parent=1 // pred_check
      _
    $region3: #{tpu_custom_call.1} parent=1 // pred_check_branch
      %12 = sbr.rel (0) target = $region5
    $region4: #{tpu_custom_call.1} parent=1 // pred_region
      _
    $region5: #{tpu_custom_call.1} parent=1 // pred_fallthru
      _
    // Predicated region
    $region6: #{tpu_custom_call.1} parent=1 // pred_check
      _
    $region7: #{tpu_custom_call.1} parent=1 // pred_check_branch
      %14 = sbr.rel (0) target = $region9
    $region8: #{tpu_custom_call.1} parent=1 // pred_region
      _
    $region9: #{tpu_custom_call.1} parent=1 // pred_fallthru
      _
    // Predicated region
    $region10: #{tpu_custom_call.1} parent=1 // pred_check
      _
    $region11: #{tpu_custom_call.1} parent=1 // pred_check_branch
      %16 = sbr.rel (0) target = $region13
    $region12: #{tpu_custom_call.1} parent=1 // pred_region
      _
    $region13: #{tpu_custom_call.1} parent=1 // pred_fallthru
      _
    // Predicated region
    $region14: #{tpu_custom_call.1} parent=1 // pred_check
      _
    $region15: #{tpu_custom_call.1} parent=1 // pred_check_branch
      %18 = sbr.rel (0) target = $region17
    $region16: #{tpu_custom_call.1} parent=1 // pred_region
      _
    $region17: #{tpu_custom_call.1} parent=1 // pred_fallthru
      _
    // Predicated region
    $region18: #{tpu_custom_call.1} parent=1 // pred_check
      _
    $region19: #{tpu_custom_call.1} parent=1 // pred_check_branch
      %20 = sbr.rel (0) target = $region21
    $region20: #{tpu_custom_call.1} parent=1 // pred_region
      _
    $region21: #{tpu_custom_call.1} parent=1 // pred_fallthru
      _
    %v21 = vld [vmem:[%s0] sm:$0xff]
    %v22 = vld [vmem:[%s1] sm:$0xff]
    %v23 = vld [vmem:[%s1 + $0x8] sm:$0xff]
    %v24 = vld [vmem:[%s1 + $0x10] sm:$0xff]
    %v25 = vld [vmem:[%s1 + $0x18] sm:$0xff]
    %v26 = vld [vmem:[%s1 + $0x20] sm:$0xff]
    %v27 = vld [vmem:[%s1 + $0x28] sm:$0xff]
    %v28 = vld [vmem:[%s1 + $0x30] sm:$0xff]
    %v29 = vld [vmem:[%s1 + $0x38] sm:$0xff]
    %v30 = vld [vmem:[%s2] sm:$0x1]
    %v32 = vlaneseq
    %v33 = vshrl.u32 %v32, 7
    %v34 = vsub.s32 0, %v33
    %v35 = vrot.slane %v30, %v34
    %vm37 = vcmask 523264
    %v39 = vsel %vm37, %v21, 0
    %41 = vmatprep.subr.mxu0 0.0
    %42 = vmatpush1.msra.mxu0 0.0
    %43 = vmatprep.subr.mxu0 0.0
    %44 = vmatpush1.msra.mxu0 0.0
    %45 = vmatprep.subr.mxu0 0.0
    %46 = vmatpush1.msra.mxu0 0.0
    %47 = vmatprep.subr.mxu0 0.0
    %48 = vmatpush1.msra.mxu0 0.0
    %49 = vmatprep.subr.mxu0 0.0
    %50 = vmatpush1.msra.mxu0 0.0
    %51 = vmatprep.subr.mxu0 0.0
    %52 = vmatpush1.msra.mxu0 0.0
    %53 = vmatprep.subr.mxu0 0.0
    %54 = vmatpush1.msra.mxu0 0.0
    %55 = vmatprep.subr.mxu0 0.0
    %56 = vmatpush1.msra.mxu0 0.0
    %57 = vmatprep.subr.mxu0 0.0
    %58 = vmatpush1.msra.mxu0 %v29
    %59 = vmatprep.subr.mxu0 0.0
    %60 = vmatpush1.msra.mxu0 %v28
    %61 = vmatprep.subr.mxu0 0.0
    %62 = vmatpush1.msra.mxu0 %v27
    %63 = vmatprep.subr.mxu0 0.0
    %64 = vmatpush1.msra.mxu0 %v26
    %65 = vmatprep.subr.mxu0 0.0
    %66 = vmatpush1.msra.mxu0 %v25
    %67 = vmatprep.subr.mxu0 0.0
    %68 = vmatpush1.msra.mxu0 %v24
    %69 = vmatprep.subr.mxu0 0.0
    %70 = vmatpush1.msra.mxu0 %v23
    %71 = vmatprep.subr.mxu0 0.0
    %72 = vmatpush1.msra.mxu0 %v22
    %73 = vmatprep.subr.mxu0 0.0
    %74 = vmatpush2.msra.mxu0 0.0
    %75 = vmatprep.subr.mxu0 0.0
    %76 = vmatpush2.msra.mxu0 0.0
    %77 = vmatprep.subr.mxu0 0.0
    %78 = vmatpush2.msra.mxu0 0.0
    %79 = vmatprep.subr.mxu0 0.0
    %80 = vmatpush2.msra.mxu0 0.0
    %81 = vmatprep.subr.mxu0 0.0
    %82 = vmatpush2.msra.mxu0 0.0
    %83 = vmatprep.subr.mxu0 0.0
    %84 = vmatpush2.msra.mxu0 0.0
    %85 = vmatprep.subr.mxu0 0.0
    %86 = vmatpush2.msra.mxu0 0.0
    %87 = vmatprep.subr.mxu0 0.0
    %88 = vmatpush2.msra.mxu0 0.0
    %89 = vmatprep.subr.mxu0 0.0
    %90 = vmatpush2.msra.mxu0 0.0
    %91 = vmatprep.subr.mxu0 0.0
    %92 = vmatpush2.msra.mxu0 0.0
    %93 = vmatprep.subr.mxu0 0.0
    %94 = vmatpush2.msra.mxu0 0.0
    %95 = vmatprep.subr.mxu0 0.0
    %96 = vmatpush2.msra.mxu0 0.0
    %97 = vmatprep.subr.mxu0 0.0
    %98 = vmatpush2.msra.mxu0 0.0
    %99 = vmatprep.subr.mxu0 0.0
    %100 = vmatpush2.msra.mxu0 0.0
    %101 = vmatprep.subr.mxu0 0.0
    %102 = vmatpush2.msra.mxu0 0.0
    %103 = vmatprep.subr.mxu0 0.0
    %104 = vmatpush2.msra.mxu0 0.0
    %105 = vmatprep.mubr.f32.mxu0 0.0
    %106 = vmatmul.mubr.f32.gmra.mxu0 %v39
    %v107 = vpop.f32.mrf.mxu0
    %v108 = vadd.f32 %v35, %v107
    %v109 = vpop.f32.mrf.mxu0
    %110 = vdwg.mxu0
    %v111 = vmul.f32 %v108, 0.01
    %v112 = vmax.f32 %v108, %v111
    %v113 = vld [vmem:[%s3] sm:$0xff]
    %v114 = vld [vmem:[%s3 + $0x8] sm:$0xff]
    %v115 = vld [vmem:[%s3 + $0x10] sm:$0xff]
    %v116 = vld [vmem:[%s3 + $0x18] sm:$0xff]
    %v117 = vld [vmem:[%s3 + $0x20] sm:$0xff]
    %v118 = vld [vmem:[%s3 + $0x28] sm:$0xff]
    %v119 = vld [vmem:[%s3 + $0x30] sm:$0xff]
    %v120 = vld [vmem:[%s3 + $0x38] sm:$0xff]
    %v121 = vld [vmem:[%s3 + $0x40] sm:$0xff]
    %v122 = vld [vmem:[%s3 + $0x48] sm:$0xff]
    %v123 = vld [vmem:[%s3 + $0x50] sm:$0xff]
    %v124 = vld [vmem:[%s3 + $0x58] sm:$0xff]
    %v125 = vld [vmem:[%s3 + $0x60] sm:$0xff]
    %v126 = vld [vmem:[%s3 + $0x68] sm:$0xff]
    %v127 = vld [vmem:[%s3 + $0x70] sm:$0xff]
    %v128 = vld [vmem:[%s3 + $0x78] sm:$0xff]
    %v129 = vld [vmem:[%s4] sm:$0x1]
    %v131 = vlaneseq
    %v132 = vshrl.u32 %v131, 7
    %v133 = vsub.s32 0, %v132
    %v134 = vrot.slane %v129, %v133
    %136 = vmatprep.subr.mxu0 0.0
    %137 = vmatpush1.msra.mxu0 %v128
    %138 = vmatprep.subr.mxu0 0.0
    %139 = vmatpush1.msra.mxu0 %v127
    %140 = vmatprep.subr.mxu0 0.0
    %141 = vmatpush1.msra.mxu0 %v126
    %142 = vmatprep.subr.mxu0 0.0
    %143 = vmatpush1.msra.mxu0 %v125
    %144 = vmatprep.subr.mxu0 0.0
    %145 = vmatpush1.msra.mxu0 %v124
    %146 = vmatprep.subr.mxu0 0.0
    %147 = vmatpush1.msra.mxu0 %v123
    %148 = vmatprep.subr.mxu0 0.0
    %149 = vmatpush1.msra.mxu0 %v122
    %150 = vmatprep.subr.mxu0 0.0
    %151 = vmatpush1.msra.mxu0 %v121
    %152 = vmatprep.subr.mxu0 0.0
    %153 = vmatpush1.msra.mxu0 %v120
    %154 = vmatprep.subr.mxu0 0.0
    %155 = vmatpush1.msra.mxu0 %v119
    %156 = vmatprep.subr.mxu0 0.0
    %157 = vmatpush1.msra.mxu0 %v118
    %158 = vmatprep.subr.mxu0 0.0
    %159 = vmatpush1.msra.mxu0 %v117
    %160 = vmatprep.subr.mxu0 0.0
    %161 = vmatpush1.msra.mxu0 %v116
    %162 = vmatprep.subr.mxu0 0.0
    %163 = vmatpush1.msra.mxu0 %v115
    %164 = vmatprep.subr.mxu0 0.0
    %165 = vmatpush1.msra.mxu0 %v114
    %166 = vmatprep.subr.mxu0 0.0
    %167 = vmatpush1.msra.mxu0 %v113
    %168 = vmatprep.subr.mxu0 0.0
    %169 = vmatpush2.msra.mxu0 0.0
    %170 = vmatprep.subr.mxu0 0.0
    %171 = vmatpush2.msra.mxu0 0.0
    %172 = vmatprep.subr.mxu0 0.0
    %173 = vmatpush2.msra.mxu0 0.0
    %174 = vmatprep.subr.mxu0 0.0
    %175 = vmatpush2.msra.mxu0 0.0
    %176 = vmatprep.subr.mxu0 0.0
    %177 = vmatpush2.msra.mxu0 0.0
    %178 = vmatprep.subr.mxu0 0.0
    %179 = vmatpush2.msra.mxu0 0.0
    %180 = vmatprep.subr.mxu0 0.0
    %181 = vmatpush2.msra.mxu0 0.0
    %182 = vmatprep.subr.mxu0 0.0
    %183 = vmatpush2.msra.mxu0 0.0
    %184 = vmatprep.subr.mxu0 0.0
    %185 = vmatpush2.msra.mxu0 0.0
    %186 = vmatprep.subr.mxu0 0.0
    %187 = vmatpush2.msra.mxu0 0.0
    %188 = vmatprep.subr.mxu0 0.0
    %189 = vmatpush2.msra.mxu0 0.0
    %190 = vmatprep.subr.mxu0 0.0
    %191 = vmatpush2.msra.mxu0 0.0
    %192 = vmatprep.subr.mxu0 0.0
    %193 = vmatpush2.msra.mxu0 0.0
    %194 = vmatprep.subr.mxu0 0.0
    %195 = vmatpush2.msra.mxu0 0.0
    %196 = vmatprep.subr.mxu0 0.0
    %197 = vmatpush2.msra.mxu0 0.0
    %198 = vmatprep.subr.mxu0 0.0
    %199 = vmatpush2.msra.mxu0 0.0
    %200 = vmatprep.mubr.f32.mxu0 0.0
    %201 = vmatmul.mubr.f32.gmra.mxu0 %v112
    %v202 = vpop.f32.mrf.mxu0
    %v203 = vadd.f32 %v134, %v202
    %v204 = vpop.f32.mrf.mxu0
    %205 = vdwg.mxu0
    %vm206 = vcmask 64512
    %207 = vst.msk [vmem:[#allocation2] sm:$0xff] %vm206, %v203
    // Predicated region
    $region22: #{tpu_custom_call.1} parent=1 // pred_check
      _
    $region23: #{tpu_custom_call.1} parent=1 // pred_check_branch
      %209 = sbr.rel (0) target = $region25
    $region24: #{tpu_custom_call.1} parent=1 // pred_region
      %s211 = ssub.s32 128, 128
      %212 = vsyncadd [#allocation3], %s211
      %s214 = sshll.u32 [#allocation2], 4
      %s215 = int_to_ptr.vmem [resolvable:$true] %s214
      %217 = dma.vmem_to_hbm [thread:$0]  %s215, 128, %s5, [#allocation3]
    $region25: #{tpu_custom_call.1} parent=1 // pred_fallthru
      _
    // Predicated region
    $region26: #{tpu_custom_call.1} parent=1 // pred_check
      _
    $region27: #{tpu_custom_call.1} parent=1 // pred_check_branch
      %219 = sbr.rel (0) target = $region29
    $region28: #{tpu_custom_call.1} parent=1 // pred_region
      %220 = dma.done [#allocation3], 128
    $region29: #{tpu_custom_call.1} parent=1 // pred_fallthru
      _
    %221 = vsyncpa [#allocation3], 1

</llo_original>
